<compile_context>
chip_gen: v7x
topology: tpu7x:2x2x1
jax: 0.10.0
libtpu: 0.0.40
codegen_flags: <defaults>
</compile_context>

<pallas_src>
import jax
import jax.numpy as jnp
from jax.experimental import pallas as pl
from jax.experimental.pallas import tpu as pltpu

LANE = 1024  # batch elements per row (lane axis); multiple of 128


def mlp_kernel(x_ref, w1_ref, b1_ref, w2_ref, b2_ref, o_ref):
    # x_ref:  (2, TILE_R, LANE) f32 in VMEM  (feature, row, lane) — full vregs
    # w1_ref: (2, 3) f32 in SMEM, b1_ref: (3,), w2_ref: (3,), b2_ref: (1,)
    # o_ref:  (TILE_R, LANE) f32 in VMEM — sublane+lane dense output slab
    x0 = x_ref[0]                      # (TILE_R, LANE)
    x1 = x_ref[1]                      # (TILE_R, LANE)

    # Hidden layer: h_k = relu(x0*W1[0,k] + x1*W1[1,k] + b1[k])  -- pure VPU MACs.
    h0 = jnp.maximum(x0 * w1_ref[0, 0] + x1 * w1_ref[1, 0] + b1_ref[0], 0.0)
    h1 = jnp.maximum(x0 * w1_ref[0, 1] + x1 * w1_ref[1, 1] + b1_ref[1], 0.0)
    h2 = jnp.maximum(x0 * w1_ref[0, 2] + x1 * w1_ref[1, 2] + b1_ref[2], 0.0)

    # Output layer: y = relu(h . w2 + b2)  -- scalar-vector multiply-adds.
    y = h0 * w2_ref[0] + h1 * w2_ref[1] + h2 * w2_ref[2] + b2_ref[0]
    o_ref[...] = jnp.maximum(y, 0.0)


def mymodel_forward(x, w1, b1, w2, b2, *, tile_rows=256, feature_major=False):
    """Forward pass of Mymodel.

    x: (N, 2) f32 (or (2, N) if feature_major=True, which skips the transpose).
    w1: (2, 3) (stored pre-transposed as (in, out)), b1: (3,), w2: (3,), b2: (1,).
    Returns (N, 1) f32.
    """
    if feature_major:
        n = x.shape[1]
        xt = x                                   # already (2, N)
    else:
        n = x.shape[0]
        xt = x.T                                 # (2, N) — one relayout pass;
                                                 # producers should prefer (2, N)

    # Batch layout: (2, r_pad, LANE); TILE_R rows per grid step (multiple of 8).
    r_needed = pl.cdiv(n, LANE)
    tile_rows = max(8, min(tile_rows, ((r_needed + 7) // 8) * 8))
    n_tiles = pl.cdiv(r_needed, tile_rows)
    r_pad = n_tiles * tile_rows
    n_pad = r_pad * LANE

    if n_pad != n:
        xt = jnp.pad(xt, ((0, 0), (0, n_pad - n)))   # pad only the tail
    x3 = xt.reshape(2, r_pad, LANE)                  # contiguous reshape (free)

    smem_spec = pl.BlockSpec(memory_space=pltpu.MemorySpace.SMEM)

    out = pl.pallas_call(
        mlp_kernel,
        out_shape=jax.ShapeDtypeStruct((r_pad, LANE), jnp.float32),
        grid=(n_tiles,),
        in_specs=[
            pl.BlockSpec((2, tile_rows, LANE), lambda i: (0, i, 0)),  # x slab
            smem_spec,                                                # w1 (resident)
            smem_spec,                                                # b1
            smem_spec,                                                # w2
            smem_spec,                                                # b2
        ],
        out_specs=pl.BlockSpec((tile_rows, LANE), lambda i: (i, 0)),
        compiler_params=pltpu.CompilerParams(
            dimension_semantics=("parallel",),       # megacore shards the batch
            vmem_limit_bytes=32 * 1024 * 1024,       # headroom on v5e; <=v7x phys
        ),
    )(x3, w1, b1, w2, b2)

    # Padded tail (x=0) rows may be nonzero (relu(relu(b1)·w2 + b2)); slice off.
    return out.reshape(-1)[:n].reshape(n, 1)


if __name__ == "__main__":
    key = jax.random.PRNGKey(0)
    kx, k1, k2, k3, k4 = jax.random.split(key, 5)

    # Parameters stored pre-transposed as (in, out) for x @ W.
    w1 = jax.random.uniform(k1, (2, 3), dtype=jnp.float32, minval=-0.5, maxval=0.5)
    b1 = jax.random.uniform(k2, (3,), dtype=jnp.float32, minval=-0.5, maxval=0.5)
    w2 = jax.random.uniform(k3, (3,), dtype=jnp.float32, minval=-0.5, maxval=0.5)
    b2 = jax.random.uniform(k4, (1,), dtype=jnp.float32, minval=-0.5, maxval=0.5)

    def ref_forward(x):
        h = jnp.maximum(x @ w1 + b1[None, :], 0.0)
        return jnp.maximum(h @ w2.reshape(3, 1) + b2[None, :], 0.0)

    # Small batch consistent with Linear(2, 3) -> Linear(3, 1).
    N = 8
    x = jax.random.normal(kx, (N, 2), dtype=jnp.float32)
    y = mymodel_forward(x, w1, b1, w2, b2)
    jax.block_until_ready(y)
    assert y.shape == (N, 1)
    assert jnp.allclose(y, ref_forward(x), atol=1e-5), "mismatch vs reference (N=8)"

    # Exercise the padded / multi-row path with a non-aligned batch.
    N2 = 2500
    x2 = jax.random.normal(kx, (N2, 2), dtype=jnp.float32)
    y2 = mymodel_forward(x2, w1, b1, w2, b2)
    jax.block_until_ready(y2)
    assert y2.shape == (N2, 1)
    assert jnp.allclose(y2, ref_forward(x2), atol=1e-5), "mismatch vs reference (N=2500)"

    # TODO(synk): original forward's print('y predictin', ...) side effect and the
    # buggy no-arg linear_function2() call are not reproduced; intended wiring only.
    print("KERNEL_OK")
</pallas_src>

<mosaic_0001>
module attributes {stable_mosaic.version = 11 : i64} {
  func.func @mlp_kernel(%arg0: i32, %arg1: memref<2x8x1024xf32, #tpu.memory_space<vmem>>, %arg2: memref<2x3xf32, #tpu.memory_space<smem>>, %arg3: memref<3xf32, #tpu.memory_space<smem>>, %arg4: memref<3xf32, #tpu.memory_space<smem>>, %arg5: memref<1xf32, #tpu.memory_space<smem>>, %arg6: memref<8x1024xf32, #tpu.memory_space<vmem>>) attributes {dimension_semantics = [#tpu.dimension_semantics<parallel>], iteration_bounds = array<i64: 1>, scalar_prefetch = 0 : i64, scratch_operands = 0 : i64, tpu.core_type = #tpu.core_type<tc>, window_params = [{transform_indices = @transform_0, window_bounds = array<i64: 2, 8, 1024>}, {transform_indices = @transform_1, window_bounds = array<i64: 2, 3>}, {transform_indices = @transform_2, window_bounds = array<i64: 3>}, {transform_indices = @transform_3, window_bounds = array<i64: 3>}, {transform_indices = @transform_4, window_bounds = array<i64: 1>}, {transform_indices = @transform_5, window_bounds = array<i64: 8, 1024>}]} {
    %c0 = arith.constant 0 : index
    %c0_0 = arith.constant 0 : index
    %c0_1 = arith.constant 0 : index
    %0 = vector.load %arg1[%c0, %c0_0, %c0_1] : memref<2x8x1024xf32, #tpu.memory_space<vmem>>, vector<1x8x1024xf32>
    %1 = vector.shape_cast %0 : vector<1x8x1024xf32> to vector<8x1024xf32>
    %c1 = arith.constant 1 : index
    %c0_2 = arith.constant 0 : index
    %c0_3 = arith.constant 0 : index
    %2 = vector.load %arg1[%c1, %c0_2, %c0_3] : memref<2x8x1024xf32, #tpu.memory_space<vmem>>, vector<1x8x1024xf32>
    %3 = vector.shape_cast %2 : vector<1x8x1024xf32> to vector<8x1024xf32>
    %c0_4 = arith.constant 0 : index
    %c0_5 = arith.constant 0 : index
    %4 = memref.load %arg2[%c0_4, %c0_5] : memref<2x3xf32, #tpu.memory_space<smem>>
    %5 = vector.broadcast %4 : f32 to vector<8x1024xf32>
    %6 = arith.mulf %1, %5 : vector<8x1024xf32>
    %c1_6 = arith.constant 1 : index
    %c0_7 = arith.constant 0 : index
    %7 = memref.load %arg2[%c1_6, %c0_7] : memref<2x3xf32, #tpu.memory_space<smem>>
    %8 = vector.broadcast %7 : f32 to vector<8x1024xf32>
    %9 = arith.mulf %3, %8 : vector<8x1024xf32>
    %10 = arith.addf %6, %9 : vector<8x1024xf32>
    %c0_8 = arith.constant 0 : index
    %11 = memref.load %arg3[%c0_8] : memref<3xf32, #tpu.memory_space<smem>>
    %12 = vector.broadcast %11 : f32 to vector<8x1024xf32>
    %13 = arith.addf %10, %12 : vector<8x1024xf32>
    %cst = arith.constant 0.000000e+00 : f32
    %14 = vector.broadcast %cst : f32 to vector<8x1024xf32>
    %15 = arith.maximumf %13, %14 : vector<8x1024xf32>
    %c0_9 = arith.constant 0 : index
    %c1_10 = arith.constant 1 : index
    %16 = memref.load %arg2[%c0_9, %c1_10] : memref<2x3xf32, #tpu.memory_space<smem>>
    %17 = vector.broadcast %16 : f32 to vector<8x1024xf32>
    %18 = arith.mulf %1, %17 : vector<8x1024xf32>
    %c1_11 = arith.constant 1 : index
    %c1_12 = arith.constant 1 : index
    %19 = memref.load %arg2[%c1_11, %c1_12] : memref<2x3xf32, #tpu.memory_space<smem>>
    %20 = vector.broadcast %19 : f32 to vector<8x1024xf32>
    %21 = arith.mulf %3, %20 : vector<8x1024xf32>
    %22 = arith.addf %18, %21 : vector<8x1024xf32>
    %c1_13 = arith.constant 1 : index
    %23 = memref.load %arg3[%c1_13] : memref<3xf32, #tpu.memory_space<smem>>
    %24 = vector.broadcast %23 : f32 to vector<8x1024xf32>
    %25 = arith.addf %22, %24 : vector<8x1024xf32>
    %cst_14 = arith.constant 0.000000e+00 : f32
    %26 = vector.broadcast %cst_14 : f32 to vector<8x1024xf32>
    %27 = arith.maximumf %25, %26 : vector<8x1024xf32>
    %c0_15 = arith.constant 0 : index
    %c2 = arith.constant 2 : index
    %28 = memref.load %arg2[%c0_15, %c2] : memref<2x3xf32, #tpu.memory_space<smem>>
    %29 = vector.broadcast %28 : f32 to vector<8x1024xf32>
    %30 = arith.mulf %1, %29 : vector<8x1024xf32>
    %c1_16 = arith.constant 1 : index
    %c2_17 = arith.constant 2 : index
    %31 = memref.load %arg2[%c1_16, %c2_17] : memref<2x3xf32, #tpu.memory_space<smem>>
    %32 = vector.broadcast %31 : f32 to vector<8x1024xf32>
    %33 = arith.mulf %3, %32 : vector<8x1024xf32>
    %34 = arith.addf %30, %33 : vector<8x1024xf32>
    %c2_18 = arith.constant 2 : index
    %35 = memref.load %arg3[%c2_18] : memref<3xf32, #tpu.memory_space<smem>>
    %36 = vector.broadcast %35 : f32 to vector<8x1024xf32>
    %37 = arith.addf %34, %36 : vector<8x1024xf32>
    %cst_19 = arith.constant 0.000000e+00 : f32
    %38 = vector.broadcast %cst_19 : f32 to vector<8x1024xf32>
    %39 = arith.maximumf %37, %38 : vector<8x1024xf32>
    %c0_20 = arith.constant 0 : index
    %40 = memref.load %arg4[%c0_20] : memref<3xf32, #tpu.memory_space<smem>>
    %41 = vector.broadcast %40 : f32 to vector<8x1024xf32>
    %42 = arith.mulf %15, %41 : vector<8x1024xf32>
    %c1_21 = arith.constant 1 : index
    %43 = memref.load %arg4[%c1_21] : memref<3xf32, #tpu.memory_space<smem>>
    %44 = vector.broadcast %43 : f32 to vector<8x1024xf32>
    %45 = arith.mulf %27, %44 : vector<8x1024xf32>
    %46 = arith.addf %42, %45 : vector<8x1024xf32>
    %c2_22 = arith.constant 2 : index
    %47 = memref.load %arg4[%c2_22] : memref<3xf32, #tpu.memory_space<smem>>
    %48 = vector.broadcast %47 : f32 to vector<8x1024xf32>
    %49 = arith.mulf %39, %48 : vector<8x1024xf32>
    %50 = arith.addf %46, %49 : vector<8x1024xf32>
    %c0_23 = arith.constant 0 : index
    %51 = memref.load %arg5[%c0_23] : memref<1xf32, #tpu.memory_space<smem>>
    %52 = vector.broadcast %51 : f32 to vector<8x1024xf32>
    %53 = arith.addf %50, %52 : vector<8x1024xf32>
    %cst_24 = arith.constant 0.000000e+00 : f32
    %54 = vector.broadcast %cst_24 : f32 to vector<8x1024xf32>
    %55 = arith.maximumf %53, %54 : vector<8x1024xf32>
    %c0_25 = arith.constant 0 : index
    %c0_26 = arith.constant 0 : index
    %56 = vector.load %arg6[%c0_25, %c0_26] : memref<8x1024xf32, #tpu.memory_space<vmem>>, vector<8x1024xf32>
    tpu.vector_store %arg6[%c0_25, %c0_26], %55 {strides = array<i32>} : memref<8x1024xf32, #tpu.memory_space<vmem>>, vector<8x1024xf32>,
    return
  }
  func.func @transform_0(%arg0: i32) -> (i32, i32, i32) {
    %c0_i32 = arith.constant 0 : i32
    %c0_i32_0 = arith.constant 0 : i32
    %c0_i32_1 = arith.constant 0 : i32
    return %c0_i32, %arg0, %c0_i32_0 : i32, i32, i32
  }
  func.func @transform_1(%arg0: i32) -> (i32, i32) {
    %c0_i32 = arith.constant 0 : i32
    %c0_i32_0 = arith.constant 0 : i32
    %c0_i32_1 = arith.constant 0 : i32
    return %c0_i32, %c0_i32_0 : i32, i32
  }
  func.func @transform_2(%arg0: i32) -> i32 {
    %c0_i32 = arith.constant 0 : i32
    %c0_i32_0 = arith.constant 0 : i32
    return %c0_i32 : i32
  }
  func.func @transform_3(%arg0: i32) -> i32 {
    %c0_i32 = arith.constant 0 : i32
    %c0_i32_0 = arith.constant 0 : i32
    return %c0_i32 : i32
  }
  func.func @transform_4(%arg0: i32) -> i32 {
    %c0_i32 = arith.constant 0 : i32
    %c0_i32_0 = arith.constant 0 : i32
    return %c0_i32 : i32
  }
  func.func @transform_5(%arg0: i32) -> (i32, i32) {
    %c0_i32 = arith.constant 0 : i32
    %c0_i32_0 = arith.constant 0 : i32
    return %arg0, %c0_i32 : i32, i32
  }
}

</mosaic_0001>

<llo_original>
// kernel: tpu_custom_call.1
$region0: #{tpu_custom_call.1}
  #allocation0 [shape = 'u32[]', space=smem, size = 0x4, offset = 0x4, fixed_abs, tag = 'smem constant byte address 0x4 - core index']
  #allocation1 [shape = 'u32[144,128]{1,0:T(1,128)}', space=vmem, size = 0x12000, scoped, tag = 'internal scratch']
  #allocation2 [shape = 'f32[1]{0:T(128)S(6)}', space=smem, size = 0x200, scoped, tag = 'scoped memory for tpu_custom_call.1']
  %s0 = inlined_call_operand.hbm [shape: f32[2,8,1024], index: 0, kind: input, shape index: {}]
  %s1 = inlined_call_operand.vmem [shape: f32[2,3], index: 1, kind: input, shape index: {}]
  %s2 = inlined_call_operand.vmem [shape: f32[3], index: 2, kind: input, shape index: {}]
  %s3 = inlined_call_operand.vmem [shape: f32[3], index: 3, kind: input, shape index: {}]
  %s4 = inlined_call_operand.<no memory space> [shape: f32[1], index: 4, kind: input, shape index: {}]
  %s5 = inlined_call_operand.hbm [shape: f32[8,1024], index: 5, kind: output, shape index: {}]
  %s6 = sld [smem:[#allocation0]]
  $region46: #{tpu_custom_call.1} parent=0
    _
  %s8 = ssub.s32 1, %s6
  %s9 = scalar_select 0, %s8, %s6
  %10 = sst [smem:[#allocation2]] %s4
  $region1: #{tpu_custom_call.1} parent=0
    #allocation3 [shape = 'u8[65536]{0}', space=vmem, size = 0x10000, scoped, tag = 'input window, operand 0, single buffered']
    #allocation4 [shape = 's32[1]{0}', space=sflag, size = 0x4, scoped, tag = 'scoped memory for tpu_custom_call.1']
    #allocation5 [shape = 's32[1]{0}', space=sflag, size = 0x4, scoped, tag = 'scoped memory for tpu_custom_call.1']
    #allocation6 [shape = 's32[1]{0}', space=sflag, size = 0x4, scoped, tag = 'scoped memory for tpu_custom_call.1']
    #allocation7 [shape = 'u8[1024]{0}', space=smem, size = 0x400, scoped, tag = 'input window, operand 1, single buffered']
    #allocation8 [shape = 'u8[512]{0}', space=smem, size = 0x200, scoped, tag = 'input window, operand 2, single buffered']
    #allocation9 [shape = 's32[1]{0}', space=sflag, size = 0x4, scoped, tag = 'scoped memory for tpu_custom_call.1']
    #allocation10 [shape = 'u8[512]{0}', space=smem, size = 0x200, scoped, tag = 'input window, operand 3, single buffered']
    #allocation11 [shape = 'u8[32768]{0}', space=vmem, size = 0x8000, scoped, tag = 'output window, operand 0, single buffered']
    %11 = vsyncpa [#allocation4], 0
    %12 = vsyncpa [#allocation6], 0
    %13 = vsyncpa [#allocation9], 0
    %14 = vsyncpa [#allocation5], 0
    // Predicated region
    $region2: #{tpu_custom_call.1} parent=1 // pred_check
      _
    $region3: #{tpu_custom_call.1} parent=1 // pred_check_branch
      %16 = sbr.rel (0) target = $region5
    $region4: #{tpu_custom_call.1} parent=1 // pred_region
      %s18 = ssub.s32 2048, 2048
      %19 = vsyncadd [#allocation4], %s18
      %s20 = sshll.u32 [#allocation3], 4
      %s21 = int_to_ptr.vmem [resolvable:$true] %s20
      %26 = dma.hbm_to_vmem [thread:$0]  %s0, 2048, %s21, [#allocation4], 1024, 1024, 64
    $region5: #{tpu_custom_call.1} parent=1 // pred_fallthru
      _
    // Predicated region
    $region6: #{tpu_custom_call.1} parent=1 // pred_check
      _
    $region7: #{tpu_custom_call.1} parent=1 // pred_check_branch
      %28 = sbr.rel (0) target = $region9
    $region8: #{tpu_custom_call.1} parent=1 // pred_region
      %s30 = ssub.s32 32, 32
      %31 = vsyncadd [#allocation6], %s30
      %s33 = sshll.u32 %s1, 4
      %s34 = int_to_ptr.vmem [resolvable:$true] %s33
      %36 = dma.vmem_to_smem %s34, 32, [#allocation7], [#allocation6]
    $region9: #{tpu_custom_call.1} parent=1 // pred_fallthru
      _
    // Predicated region
    $region10: #{tpu_custom_call.1} parent=1 // pred_check
      _
    $region11: #{tpu_custom_call.1} parent=1 // pred_check_branch
      %38 = sbr.rel (0) target = $region13
    $region12: #{tpu_custom_call.1} parent=1 // pred_region
      %s40 = ssub.s32 16, 16
      %41 = vsyncadd [#allocation9], %s40
      %s43 = sshll.u32 %s2, 4
      %s44 = int_to_ptr.vmem [resolvable:$true] %s43
      %46 = dma.vmem_to_smem %s44, 16, [#allocation8], [#allocation9]
    $region13: #{tpu_custom_call.1} parent=1 // pred_fallthru
      _
    // Predicated region
    $region14: #{tpu_custom_call.1} parent=1 // pred_check
      _
    $region15: #{tpu_custom_call.1} parent=1 // pred_check_branch
      %48 = sbr.rel (0) target = $region17
    $region16: #{tpu_custom_call.1} parent=1 // pred_region
      %s50 = ssub.s32 16, 16
      %51 = vsyncadd [#allocation9], %s50
      %s53 = sshll.u32 %s3, 4
      %s54 = int_to_ptr.vmem [resolvable:$true] %s53
      %56 = dma.vmem_to_smem %s54, 16, [#allocation10], [#allocation9]
    $region17: #{tpu_custom_call.1} parent=1 // pred_fallthru
      _
    // Predicated region
    $region18: #{tpu_custom_call.1} parent=1 // pred_check
      _
    $region19: #{tpu_custom_call.1} parent=1 // pred_check_branch
      %58 = sbr.rel (0) target = $region21
    $region20: #{tpu_custom_call.1} parent=1 // pred_region
      _
    $region21: #{tpu_custom_call.1} parent=1 // pred_fallthru
      _
    // Predicated region
    $region22: #{tpu_custom_call.1} parent=1 // pred_check
      _
    $region23: #{tpu_custom_call.1} parent=1 // pred_check_branch
      %60 = sbr.rel (0) target = $region25
    $region24: #{tpu_custom_call.1} parent=1 // pred_region
      %61 = dma.done [#allocation4], 2048
    $region25: #{tpu_custom_call.1} parent=1 // pred_fallthru
      _
    // Predicated region
    $region26: #{tpu_custom_call.1} parent=1 // pred_check
      _
    $region27: #{tpu_custom_call.1} parent=1 // pred_check_branch
      %63 = sbr.rel (0) target = $region29
    $region28: #{tpu_custom_call.1} parent=1 // pred_region
      %64 = dma.done [#allocation6], 32
    $region29: #{tpu_custom_call.1} parent=1 // pred_fallthru
      _
    // Predicated region
    $region30: #{tpu_custom_call.1} parent=1 // pred_check
      _
    $region31: #{tpu_custom_call.1} parent=1 // pred_check_branch
      %66 = sbr.rel (0) target = $region33
    $region32: #{tpu_custom_call.1} parent=1 // pred_region
      %67 = dma.done [#allocation9], 16
    $region33: #{tpu_custom_call.1} parent=1 // pred_fallthru
      _
    // Predicated region
    $region34: #{tpu_custom_call.1} parent=1 // pred_check
      _
    $region35: #{tpu_custom_call.1} parent=1 // pred_check_branch
      %69 = sbr.rel (0) target = $region37
    $region36: #{tpu_custom_call.1} parent=1 // pred_region
      %70 = dma.done [#allocation9], 16
    $region37: #{tpu_custom_call.1} parent=1 // pred_fallthru
      _
    %71 = sfence
    %v72 = vld [vmem:[#allocation3] sm:$0xff]
    %v73 = vld [vmem:[#allocation3 + $0x8] sm:$0xff]
    %v74 = vld [vmem:[#allocation3 + $0x10] sm:$0xff]
    %v75 = vld [vmem:[#allocation3 + $0x18] sm:$0xff]
    %v76 = vld [vmem:[#allocation3 + $0x20] sm:$0xff]
    %v77 = vld [vmem:[#allocation3 + $0x28] sm:$0xff]
    %v78 = vld [vmem:[#allocation3 + $0x30] sm:$0xff]
    %v79 = vld [vmem:[#allocation3 + $0x38] sm:$0xff]
    %s80 = scalar_lea.vmem [#allocation3], 64
    %v81 = vld [vmem:[%s80] sm:$0xff]
    %v82 = vld [vmem:[%s80 + $0x8] sm:$0xff]
    %v83 = vld [vmem:[%s80 + $0x10] sm:$0xff]
    %v84 = vld [vmem:[%s80 + $0x18] sm:$0xff]
    %v85 = vld [vmem:[%s80 + $0x20] sm:$0xff]
    %v86 = vld [vmem:[%s80 + $0x28] sm:$0xff]
    %v87 = vld [vmem:[%s80 + $0x30] sm:$0xff]
    %v88 = vld [vmem:[%s80 + $0x38] sm:$0xff]
    %s89 = sld [smem:[#allocation7]]
    %v90 = vstv %s89
    %v91 = vmul.f32 %v72, %v90
    %v92 = vmul.f32 %v73, %v90
    %v93 = vmul.f32 %v74, %v90
    %v94 = vmul.f32 %v75, %v90
    %v95 = vmul.f32 %v76, %v90
    %v96 = vmul.f32 %v77, %v90
    %v97 = vmul.f32 %v78, %v90
    %v98 = vmul.f32 %v79, %v90
    %s99 = sld [smem:[#allocation7 + $0x80]]
    %v100 = vstv %s99
    %v101 = vmul.f32 %v81, %v100
    %v102 = vmul.f32 %v82, %v100
    %v103 = vmul.f32 %v83, %v100
    %v104 = vmul.f32 %v84, %v100
    %v105 = vmul.f32 %v85, %v100
    %v106 = vmul.f32 %v86, %v100
    %v107 = vmul.f32 %v87, %v100
    %v108 = vmul.f32 %v88, %v100
    %v109 = vadd.f32 %v91, %v101
    %v110 = vadd.f32 %v92, %v102
    %v111 = vadd.f32 %v93, %v103
    %v112 = vadd.f32 %v94, %v104
    %v113 = vadd.f32 %v95, %v105
    %v114 = vadd.f32 %v96, %v106
    %v115 = vadd.f32 %v97, %v107
    %v116 = vadd.f32 %v98, %v108
    %s117 = sld [smem:[#allocation8]]
    %v118 = vstv %s117
    %v119 = vadd.f32 %v109, %v118
    %v120 = vadd.f32 %v110, %v118
    %v121 = vadd.f32 %v111, %v118
    %v122 = vadd.f32 %v112, %v118
    %v123 = vadd.f32 %v113, %v118
    %v124 = vadd.f32 %v114, %v118
    %v125 = vadd.f32 %v115, %v118
    %v126 = vadd.f32 %v116, %v118
    %v127 = vmax.f32 %v119, 0.0
    %v128 = vmax.f32 %v120, 0.0
    %v129 = vmax.f32 %v121, 0.0
    %v130 = vmax.f32 %v122, 0.0
    %v131 = vmax.f32 %v123, 0.0
    %v132 = vmax.f32 %v124, 0.0
    %v133 = vmax.f32 %v125, 0.0
    %v134 = vmax.f32 %v126, 0.0
    %s135 = sld [smem:[#allocation7 + $0x1]]
    %v136 = vstv %s135
    %v137 = vmul.f32 %v72, %v136
    %v138 = vmul.f32 %v73, %v136
    %v139 = vmul.f32 %v74, %v136
    %v140 = vmul.f32 %v75, %v136
    %v141 = vmul.f32 %v76, %v136
    %v142 = vmul.f32 %v77, %v136
    %v143 = vmul.f32 %v78, %v136
    %v144 = vmul.f32 %v79, %v136
    %s145 = sld [smem:[#allocation7 + $0x81]]
    %v146 = vstv %s145
    %v147 = vmul.f32 %v81, %v146
    %v148 = vmul.f32 %v82, %v146
    %v149 = vmul.f32 %v83, %v146
    %v150 = vmul.f32 %v84, %v146
    %v151 = vmul.f32 %v85, %v146
    %v152 = vmul.f32 %v86, %v146
    %v153 = vmul.f32 %v87, %v146
    %v154 = vmul.f32 %v88, %v146
    %v155 = vadd.f32 %v137, %v147
    %v156 = vadd.f32 %v138, %v148
    %v157 = vadd.f32 %v139, %v149
    %v158 = vadd.f32 %v140, %v150
    %v159 = vadd.f32 %v141, %v151
    %v160 = vadd.f32 %v142, %v152
    %v161 = vadd.f32 %v143, %v153
    %v162 = vadd.f32 %v144, %v154
    %s163 = sld [smem:[#allocation8 + $0x1]]
    %v164 = vstv %s163
    %v165 = vadd.f32 %v155, %v164
    %v166 = vadd.f32 %v156, %v164
    %v167 = vadd.f32 %v157, %v164
    %v168 = vadd.f32 %v158, %v164
    %v169 = vadd.f32 %v159, %v164
    %v170 = vadd.f32 %v160, %v164
    %v171 = vadd.f32 %v161, %v164
    %v172 = vadd.f32 %v162, %v164
    %v173 = vmax.f32 %v165, 0.0
    %v174 = vmax.f32 %v166, 0.0
    %v175 = vmax.f32 %v167, 0.0
    %v176 = vmax.f32 %v168, 0.0
    %v177 = vmax.f32 %v169, 0.0
    %v178 = vmax.f32 %v170, 0.0
    %v179 = vmax.f32 %v171, 0.0
    %v180 = vmax.f32 %v172, 0.0
    %s181 = sld [smem:[#allocation7 + $0x2]]
    %v182 = vstv %s181
    %v183 = vmul.f32 %v72, %v182
    %v184 = vmul.f32 %v73, %v182
    %v185 = vmul.f32 %v74, %v182
    %v186 = vmul.f32 %v75, %v182
    %v187 = vmul.f32 %v76, %v182
    %v188 = vmul.f32 %v77, %v182
    %v189 = vmul.f32 %v78, %v182
    %v190 = vmul.f32 %v79, %v182
    %s191 = sld [smem:[#allocation7 + $0x82]]
    %v192 = vstv %s191
    %v193 = vmul.f32 %v81, %v192
    %v194 = vmul.f32 %v82, %v192
    %v195 = vmul.f32 %v83, %v192
    %v196 = vmul.f32 %v84, %v192
    %v197 = vmul.f32 %v85, %v192
    %v198 = vmul.f32 %v86, %v192
    %v199 = vmul.f32 %v87, %v192
    %v200 = vmul.f32 %v88, %v192
    %v201 = vadd.f32 %v183, %v193
    %v202 = vadd.f32 %v184, %v194
    %v203 = vadd.f32 %v185, %v195
    %v204 = vadd.f32 %v186, %v196
    %v205 = vadd.f32 %v187, %v197
    %v206 = vadd.f32 %v188, %v198
    %v207 = vadd.f32 %v189, %v199
    %v208 = vadd.f32 %v190, %v200
    %s209 = sld [smem:[#allocation8 + $0x2]]
    %v210 = vstv %s209
    %v211 = vadd.f32 %v201, %v210
    %v212 = vadd.f32 %v202, %v210
    %v213 = vadd.f32 %v203, %v210
    %v214 = vadd.f32 %v204, %v210
    %v215 = vadd.f32 %v205, %v210
    %v216 = vadd.f32 %v206, %v210
    %v217 = vadd.f32 %v207, %v210
    %v218 = vadd.f32 %v208, %v210
    %v219 = vmax.f32 %v211, 0.0
    %v220 = vmax.f32 %v212, 0.0
    %v221 = vmax.f32 %v213, 0.0
    %v222 = vmax.f32 %v214, 0.0
    %v223 = vmax.f32 %v215, 0.0
    %v224 = vmax.f32 %v216, 0.0
    %v225 = vmax.f32 %v217, 0.0
    %v226 = vmax.f32 %v218, 0.0
    %s227 = sld [smem:[#allocation10]]
    %v228 = vstv %s227
    %v229 = vmul.f32 %v127, %v228
    %v230 = vmul.f32 %v128, %v228
    %v231 = vmul.f32 %v129, %v228
    %v232 = vmul.f32 %v130, %v228
    %v233 = vmul.f32 %v131, %v228
    %v234 = vmul.f32 %v132, %v228
    %v235 = vmul.f32 %v133, %v228
    %v236 = vmul.f32 %v134, %v228
    %s237 = sld [smem:[#allocation10 + $0x1]]
    %v238 = vstv %s237
    %v239 = vmul.f32 %v173, %v238
    %v240 = vmul.f32 %v174, %v238
    %v241 = vmul.f32 %v175, %v238
    %v242 = vmul.f32 %v176, %v238
    %v243 = vmul.f32 %v177, %v238
    %v244 = vmul.f32 %v178, %v238
    %v245 = vmul.f32 %v179, %v238
    %v246 = vmul.f32 %v180, %v238
    %v247 = vadd.f32 %v229, %v239
    %v248 = vadd.f32 %v230, %v240
    %v249 = vadd.f32 %v231, %v241
    %v250 = vadd.f32 %v232, %v242
    %v251 = vadd.f32 %v233, %v243
    %v252 = vadd.f32 %v234, %v244
    %v253 = vadd.f32 %v235, %v245
    %v254 = vadd.f32 %v236, %v246
    %s255 = sld [smem:[#allocation10 + $0x2]]
    %v256 = vstv %s255
    %v257 = vmul.f32 %v219, %v256
    %v258 = vmul.f32 %v220, %v256
    %v259 = vmul.f32 %v221, %v256
    %v260 = vmul.f32 %v222, %v256
    %v261 = vmul.f32 %v223, %v256
    %v262 = vmul.f32 %v224, %v256
    %v263 = vmul.f32 %v225, %v256
    %v264 = vmul.f32 %v226, %v256
    %v265 = vadd.f32 %v247, %v257
    %v266 = vadd.f32 %v248, %v258
    %v267 = vadd.f32 %v249, %v259
    %v268 = vadd.f32 %v250, %v260
    %v269 = vadd.f32 %v251, %v261
    %v270 = vadd.f32 %v252, %v262
    %v271 = vadd.f32 %v253, %v263
    %v272 = vadd.f32 %v254, %v264
    %s273 = sld [smem:[#allocation2]]
    %v274 = vstv %s273
    %v275 = vadd.f32 %v265, %v274
    %v276 = vadd.f32 %v266, %v274
    %v277 = vadd.f32 %v267, %v274
    %v278 = vadd.f32 %v268, %v274
    %v279 = vadd.f32 %v269, %v274
    %v280 = vadd.f32 %v270, %v274
    %v281 = vadd.f32 %v271, %v274
    %v282 = vadd.f32 %v272, %v274
    %v283 = vmax.f32 %v275, 0.0
    %v284 = vmax.f32 %v276, 0.0
    %v285 = vmax.f32 %v277, 0.0
    %v286 = vmax.f32 %v278, 0.0
    %v287 = vmax.f32 %v279, 0.0
    %v288 = vmax.f32 %v280, 0.0
    %v289 = vmax.f32 %v281, 0.0
    %v290 = vmax.f32 %v282, 0.0
    %291 = vst [vmem:[#allocation11] sm:$0xff] %v283
    %292 = vst [vmem:[#allocation11 + $0x8] sm:$0xff] %v284
    %293 = vst [vmem:[#allocation11 + $0x10] sm:$0xff] %v285
    %294 = vst [vmem:[#allocation11 + $0x18] sm:$0xff] %v286
    %295 = vst [vmem:[#allocation11 + $0x20] sm:$0xff] %v287
    %296 = vst [vmem:[#allocation11 + $0x28] sm:$0xff] %v288
    %297 = vst [vmem:[#allocation11 + $0x30] sm:$0xff] %v289
    %298 = vst [vmem:[#allocation11 + $0x38] sm:$0xff] %v290
    // Predicated region
    $region38: #{tpu_custom_call.1} parent=1 // pred_check
      _
    $region39: #{tpu_custom_call.1} parent=1 // pred_check_branch
      %300 = sbr.rel (0) target = $region41
    $region40: #{tpu_custom_call.1} parent=1 // pred_region
      %s302 = ssub.s32 1024, 1024
      %303 = vsyncadd [#allocation5], %s302
      %s305 = sshll.u32 [#allocation11], 4
      %s306 = int_to_ptr.vmem [resolvable:$true] %s305
      %308 = dma.vmem_to_hbm [thread:$0]  %s306, 1024, %s5, [#allocation5]
    $region41: #{tpu_custom_call.1} parent=1 // pred_fallthru
      _
    // Predicated region
    $region42: #{tpu_custom_call.1} parent=1 // pred_check
      _
    $region43: #{tpu_custom_call.1} parent=1 // pred_check_branch
      %310 = sbr.rel (0) target = $region45
    $region44: #{tpu_custom_call.1} parent=1 // pred_region
      %311 = dma.done [#allocation5], 1024
    $region45: #{tpu_custom_call.1} parent=1 // pred_fallthru
      _
    %312 = vsyncpa [#allocation4], 1
    %313 = vsyncpa [#allocation5], 1
    %314 = vsyncpa [#allocation6], 1
    %315 = vsyncpa [#allocation9], 1

</llo_original>
